<compile_context>
chip_gen: v6e
topology: v6e:2x2x1
jax: 0.10.0
libtpu: 0.0.40
codegen_flags: <defaults>
</compile_context>

<pallas_src>
import jax
import jax.numpy as jnp
from jax.experimental import pallas as pl
from jax.experimental.pallas import tpu as pltpu


def _make_fuse_kernel(nb):
    """1x1-conv fusion over an (NB, C, TN) tile; unrolled over the NB batches."""

    def kernel(wx_ref, wy_ref, b_ref, x_ref, y_ref, o_ref):
        wx = wx_ref[...]          # (C_out, C)
        wy = wy_ref[...]          # (C_out, C)
        bias = b_ref[...]         # (C_out, 1), f32
        for i in range(nb):       # nb is small & static -> fully unrolled
            acc = jnp.dot(wx, x_ref[i], preferred_element_type=jnp.float32)
            acc = acc + jnp.dot(wy, y_ref[i], preferred_element_type=jnp.float32)
            o_ref[i] = (acc + bias).astype(o_ref.dtype)

    return kernel


def _vmem_plan():
    """Return (tile byte budget, vmem_limit_bytes), generation-aware."""
    cap = None
    try:
        info = pltpu.get_tpu_info()
        cap = int(getattr(info, "vmem_capacity_bytes", 0)) or None
    except Exception:
        cap = None
    if cap is None:
        cap = 64 * 1024 * 1024            # conservative: assume v7x-sized VMEM
    if cap <= 64 * 1024 * 1024:           # v7x: 64 MiB physical per TC
        budget, limit = 20 * 1024 * 1024, 48 * 1024 * 1024
    else:                                 # v5e / v6e: 128 MiB physical
        budget, limit = 40 * 1024 * 1024, 96 * 1024 * 1024
    return budget, min(limit, cap)


def simple_fusion_block(x, y, weight, bias, *, tn_max=32768, nb_max=8):
    """x, y: (N, C, H, W).  weight: (C_out, 2C, 1, 1).  bias: (C_out,)."""
    N, C, H, W = x.shape
    C_out = weight.shape[0]
    P = H * W

    # Free reshapes: keep NCHW layout, pixels become the (lane) minor axis.
    xf = x.reshape(N, C, P)
    yf = y.reshape(N, C, P)

    # Split the 1x1-conv weight into the x-half and the y-half. bf16 inputs
    # take the native bf16 MXU path; everything else computes in f32.
    wdtype = jnp.bfloat16 if x.dtype == jnp.bfloat16 else jnp.float32
    w2d = weight.reshape(C_out, 2 * C)
    wx = w2d[:, :C].astype(wdtype)          # (C_out, C)
    wy = w2d[:, C:].astype(wdtype)          # (C_out, C)
    b2d = bias.astype(jnp.float32).reshape(C_out, 1)

    budget, vmem_limit = _vmem_plan()
    itemsize = jnp.dtype(x.dtype).itemsize
    # x + y + out, double-buffered, per pixel per batch element.
    bytes_per_px = (2 * C + C_out) * itemsize * 2

    # Pixel tile: lane-dense, as large as the budget allows; ragged tails are
    # handled by Pallas block clipping (no jnp.pad).
    tn_cap = max(128, min(tn_max, budget // max(1, bytes_per_px)))
    tn = P if P <= tn_cap else (tn_cap // 128) * 128

    # Batch block: fill the remaining budget so small images still produce
    # large DMAs per grid step (amortizes the ~0.35us per-step overhead).
    nb_cap = max(1, budget // max(1, bytes_per_px * tn))
    NB = int(min(N, nb_cap, nb_max))
    # Keep at least 2 grid steps whenever N allows it so v7x can use both TCs.
    if N > 1 and pl.cdiv(N, NB) * pl.cdiv(P, tn) < 2:
        NB = int(pl.cdiv(N, 2))
    grid = (pl.cdiv(N, NB), pl.cdiv(P, tn))

    out_flat = pl.pallas_call(
        _make_fuse_kernel(NB),
        out_shape=jax.ShapeDtypeStruct((N, C_out, P), x.dtype),
        grid=grid,
        in_specs=[
            pl.BlockSpec((C_out, C), lambda n, j: (0, 0)),     # wx (resident)
            pl.BlockSpec((C_out, C), lambda n, j: (0, 0)),     # wy (resident)
            pl.BlockSpec((C_out, 1), lambda n, j: (0, 0)),     # bias (resident)
            pl.BlockSpec((NB, C, tn), lambda n, j: (n, 0, j)),  # x tile
            pl.BlockSpec((NB, C, tn), lambda n, j: (n, 0, j)),  # y tile
        ],
        out_specs=pl.BlockSpec((NB, C_out, tn), lambda n, j: (n, 0, j)),
        compiler_params=pltpu.CompilerParams(
            dimension_semantics=("parallel", "parallel"),
            vmem_limit_bytes=vmem_limit,
        ),
    )(wx, wy, b2d, xf, yf)

    # (N, C_out, H*W) -> (N, C_out, H, W): free reshape, no transpose.
    return out_flat.reshape(N, C_out, H, W)


if __name__ == "__main__":
    key = jax.random.PRNGKey(0)
    kx, ky, kw, kb = jax.random.split(key, 4)

    N, C, H, W = 2, 4, 16, 16
    x = jax.random.normal(kx, (N, C, H, W), dtype=jnp.float32)
    y = jax.random.normal(ky, (N, C, H, W), dtype=jnp.float32)

    # Deterministic parameter init (Conv2d(2C -> C, kernel_size=1) shapes).
    fan_in = 2 * C
    bound = 1.0 / (fan_in ** 0.5)
    weight = jax.random.uniform(kw, (C, 2 * C, 1, 1), jnp.float32, -bound, bound)
    bias = jax.random.uniform(kb, (C,), jnp.float32, -bound, bound)

    out = simple_fusion_block(x, y, weight, bias)
    out = jax.block_until_ready(out)

    # Pure-JAX reference (1x1 conv == per-pixel matmul over concat channels).
    cat = jnp.concatenate([x, y], axis=1)                     # (N, 2C, H, W)
    ref = jnp.einsum("nchw,oc->nohw", cat, weight.reshape(C, 2 * C)) \
        + bias[None, :, None, None]
    assert out.shape == (N, C, H, W)
    assert jnp.allclose(out, ref, atol=1e-5, rtol=1e-5)

    print("KERNEL_OK")
</pallas_src>

<mosaic_0001>
module attributes {stable_mosaic.version = 11 : i64} {
  func.func @kernel(%arg0: i32, %arg1: i32, %arg2: memref<4x4xf32, #tpu.memory_space<vmem>>, %arg3: memref<4x4xf32, #tpu.memory_space<vmem>>, %arg4: memref<4x1xf32, #tpu.memory_space<vmem>>, %arg5: memref<1x4x256xf32, #tpu.memory_space<vmem>>, %arg6: memref<1x4x256xf32, #tpu.memory_space<vmem>>, %arg7: memref<1x4x256xf32, #tpu.memory_space<vmem>>) attributes {dimension_semantics = [#tpu.dimension_semantics<parallel>, #tpu.dimension_semantics<parallel>], iteration_bounds = array<i64: 2, 1>, scalar_prefetch = 0 : i64, scratch_operands = 0 : i64, tpu.core_type = #tpu.core_type<tc>, window_params = [{pipeline_mode = #tpu.pipeline_mode<synchronous>, transform_indices = @transform_0, window_bounds = array<i64: 4, 4>}, {pipeline_mode = #tpu.pipeline_mode<synchronous>, transform_indices = @transform_1, window_bounds = array<i64: 4, 4>}, {pipeline_mode = #tpu.pipeline_mode<synchronous>, transform_indices = @transform_2, window_bounds = array<i64: 4, 1>}, {transform_indices = @transform_3, window_bounds = array<i64: 1, 4, 256>}, {transform_indices = @transform_4, window_bounds = array<i64: 1, 4, 256>}, {transform_indices = @transform_5, window_bounds = array<i64: 1, 4, 256>}]} {
    %c0 = arith.constant 0 : index
    %c0_0 = arith.constant 0 : index
    %0 = vector.load %arg2[%c0, %c0_0] : memref<4x4xf32, #tpu.memory_space<vmem>>, vector<4x4xf32>
    %c0_1 = arith.constant 0 : index
    %c0_2 = arith.constant 0 : index
    %1 = vector.load %arg3[%c0_1, %c0_2] : memref<4x4xf32, #tpu.memory_space<vmem>>, vector<4x4xf32>
    %c0_3 = arith.constant 0 : index
    %c0_4 = arith.constant 0 : index
    %2 = vector.load %arg4[%c0_3, %c0_4] : memref<4x1xf32, #tpu.memory_space<vmem>>, vector<4x1xf32>
    %c0_5 = arith.constant 0 : index
    %c0_6 = arith.constant 0 : index
    %c0_7 = arith.constant 0 : index
    %3 = vector.load %arg5[%c0_5, %c0_6, %c0_7] : memref<1x4x256xf32, #tpu.memory_space<vmem>>, vector<1x4x256xf32>
    %4 = vector.shape_cast %3 : vector<1x4x256xf32> to vector<4x256xf32>
    %cst = arith.constant dense<0.000000e+00> : vector<4x256xf32>
    %5 = tpu.matmul %0, %4, %cst {dimension_numbers = #tpu.dot_dimension_numbers<[1], [0], [0], [1], [0, 0, 1, 1], [], []>} : vector<4x4xf32>, vector<4x256xf32>, vector<4x256xf32> -> vector<4x256xf32>
    %c0_8 = arith.constant 0 : index
    %c0_9 = arith.constant 0 : index
    %c0_10 = arith.constant 0 : index
    %6 = vector.load %arg6[%c0_8, %c0_9, %c0_10] : memref<1x4x256xf32, #tpu.memory_space<vmem>>, vector<1x4x256xf32>
    %7 = vector.shape_cast %6 : vector<1x4x256xf32> to vector<4x256xf32>
    %cst_11 = arith.constant dense<0.000000e+00> : vector<4x256xf32>
    %8 = tpu.matmul %1, %7, %cst_11 {dimension_numbers = #tpu.dot_dimension_numbers<[1], [0], [0], [1], [0, 0, 1, 1], [], []>} : vector<4x4xf32>, vector<4x256xf32>, vector<4x256xf32> -> vector<4x256xf32>
    %9 = arith.addf %5, %8 : vector<4x256xf32>
    %10 = vector.broadcast %2 : vector<4x1xf32> to vector<4x256xf32>
    %11 = arith.addf %9, %10 : vector<4x256xf32>
    %c0_12 = arith.constant 0 : index
    %c0_13 = arith.constant 0 : index
    %c0_14 = arith.constant 0 : index
    %12 = vector.load %arg7[%c0_12, %c0_13, %c0_14] : memref<1x4x256xf32, #tpu.memory_space<vmem>>, vector<1x4x256xf32>
    %13 = vector.shape_cast %12 : vector<1x4x256xf32> to vector<4x256xf32>
    %14 = vector.shape_cast %11 : vector<4x256xf32> to vector<1x4x256xf32>
    tpu.vector_store %arg7[%c0_12, %c0_13, %c0_14], %14 {strides = array<i32>} : memref<1x4x256xf32, #tpu.memory_space<vmem>>, vector<1x4x256xf32>,
    return
  }
  func.func @transform_0(%arg0: i32, %arg1: i32) -> (i32, i32) {
    %c0_i32 = arith.constant 0 : i32
    %c0_i32_0 = arith.constant 0 : i32
    %c0_i32_1 = arith.constant 0 : i32
    return %c0_i32, %c0_i32_0 : i32, i32
  }
  func.func @transform_1(%arg0: i32, %arg1: i32) -> (i32, i32) {
    %c0_i32 = arith.constant 0 : i32
    %c0_i32_0 = arith.constant 0 : i32
    %c0_i32_1 = arith.constant 0 : i32
    return %c0_i32, %c0_i32_0 : i32, i32
  }
  func.func @transform_2(%arg0: i32, %arg1: i32) -> (i32, i32) {
    %c0_i32 = arith.constant 0 : i32
    %c0_i32_0 = arith.constant 0 : i32
    %c0_i32_1 = arith.constant 0 : i32
    return %c0_i32, %c0_i32_0 : i32, i32
  }
  func.func @transform_3(%arg0: i32, %arg1: i32) -> (i32, i32, i32) {
    %c0_i32 = arith.constant 0 : i32
    %c0_i32_0 = arith.constant 0 : i32
    return %arg0, %c0_i32, %arg1 : i32, i32, i32
  }
  func.func @transform_4(%arg0: i32, %arg1: i32) -> (i32, i32, i32) {
    %c0_i32 = arith.constant 0 : i32
    %c0_i32_0 = arith.constant 0 : i32
    return %arg0, %c0_i32, %arg1 : i32, i32, i32
  }
  func.func @transform_5(%arg0: i32, %arg1: i32) -> (i32, i32, i32) {
    %c0_i32 = arith.constant 0 : i32
    %c0_i32_0 = arith.constant 0 : i32
    return %arg0, %c0_i32, %arg1 : i32, i32, i32
  }
}

</mosaic_0001>

<llo_original>
// kernel: tpu_custom_call.1
$region0: #{tpu_custom_call.1}
  #allocation0 [shape = 'u32[]', space=smem, size = 0x4, offset = 0x4, fixed_abs, tag = 'smem constant byte address 0x4 - core index']
  #allocation1 [shape = 'u32[144,128]{1,0:T(1,128)}', space=vmem, size = 0x12000, scoped, tag = 'internal scratch']
  %s0 = inlined_call_operand.vmem [shape: f32[4,4], index: 0, kind: input, shape index: {}]
  %s1 = inlined_call_operand.hbm [shape: f32[4,4], index: 1, kind: input, shape index: {}]
  %s2 = inlined_call_operand.vmem [shape: f32[4,1], index: 2, kind: input, shape index: {}]
  %s3 = inlined_call_operand.hbm [shape: f32[2,4,256], index: 3, kind: input, shape index: {}]
  %s4 = inlined_call_operand.hbm [shape: f32[2,4,256], index: 4, kind: input, shape index: {}]
  %s5 = inlined_call_operand.hbm [shape: f32[2,4,256], index: 5, kind: output, shape index: {}]
  %s6 = sld [smem:[#allocation0]]
  $region65: #{tpu_custom_call.1} parent=0
    _
  %s8 = ssub.s32 1, %s6
  %s9 = scalar_select 0, %s8, %s6
  $region1: #{tpu_custom_call.1} parent=0
    #allocation2 [shape = 'u8[2048]{0}', space=vmem, size = 0x800, scoped, tag = 'input window, operand 1, single buffered']
    #allocation3 [shape = 's32[2]{0}', space=sflag, size = 0x8, scoped, tag = 'scoped memory for tpu_custom_call.1']
    #allocation4 [shape = 's32[2]{0}', space=sflag, size = 0x8, scoped, tag = 'scoped memory for tpu_custom_call.1']
    #allocation5 [shape = 'u8[8192]{0}', space=vmem, size = 0x2000, scoped, tag = 'input window, operand 3']
    #allocation6 [shape = 's32[2]{0}', space=sflag, size = 0x8, scoped, tag = 'scoped memory for tpu_custom_call.1']
    #allocation7 [shape = 'u8[8192]{0}', space=vmem, size = 0x2000, scoped, tag = 'input window, operand 4']
    #allocation8 [shape = 'u8[8192]{0}', space=vmem, size = 0x2000, scoped, tag = 'output window, operand 0']
    %10 = vsyncpa [#allocation3], 0
    %11 = vsyncpa [#allocation6], 0
    %s12 = scalar_lea.sflag [#allocation6], 1
    %13 = vsyncpa %s12, 0
    %14 = vsyncpa [#allocation4], 0
    %s15 = scalar_lea.sflag [#allocation4], 1
    %16 = vsyncpa %s15, 0
    loop: start=0, step=1, limit=4
    $region2: #{tpu_custom_call.1} parent=1 // loop_pre_header
      _
    $region3: #{tpu_custom_call.1} parent=1 // loop_header
      %s18 = sphi 0, %s22
      %p19 = scmp.ge.s32.totalorder %s18, 4
      %s25 = sphi 0, %s37
      %s26 = sphi 0, %s33
      %s27 = sphi 0, %s25
      %s28 = sphi 0, %s26
      %s29 = sphi 0, %s27
      %s30 = sphi 0, %s28
      %s38 = sphi 0, %s38
      %s40 = sphi 0, %s38
      %s41 = sphi 0, %s40
      %s55 = sphi 0, %s41
      %s59 = sphi 0, %s59
      %s61 = sphi 0, %s59
      %s62 = sphi 0, %s61
      %s76 = sphi 0, %s62
      %s80 = sphi 0, %s80
      %s82 = sphi 0, %s80
      %s83 = sphi 0, %s82
      %s97 = sphi 0, %s83
      %s105 = sphi 0, %s107
      %s108 = sphi 0, %s105
      %s109 = sphi 0, %s108
      %s125 = sphi 0, %s109
      %s133 = sphi 0, %s135
      %s136 = sphi 0, %s133
      %s137 = sphi 0, %s136
      %s153 = sphi 0, %s137
      %s161 = sphi 0, %s163
      %s164 = sphi 0, %s161
      %s165 = sphi 0, %s164
      %s181 = sphi 0, %s165
    $region4: #{tpu_custom_call.1} parent=1 // loop_header_branch
      %21 = sbr.rel (%p19) target = $region8
    $region5: #{tpu_custom_call.1} parent=1 // loop_body
      %s23 = ssub.s32 %s18, 1
      %s24 = ssub.s32 %s18, 2
      %s31 = sadd.s32 1, %s26
      %p32 = scmp.ge.s32.totalorder %s31, 1
      %s33 = scalar_select %p32, 0, %s31
      %s34 = sadd.s32 1, %s25
      %s35 = scalar_select %p32, %s34, %s25
      %p36 = scmp.ge.s32.totalorder %s35, 2
      %s37 = scalar_select %p36, 0, %s35
      %s39 = sadd.s32 %s38, 1
      %p42 = scmp.eq.s32.totalorder %s18, 1
      %p43 = scmp.ne.s32.totalorder %s38, %s40
      %p44 = scmp.eq.s32.totalorder %s18, 0
      %p45 = por %p43, %p44
      %p46 = scmp.ne.s32.totalorder %s38, %s40
      %p47 = scmp.eq.s32.totalorder %s23, 1
      %p48 = por %p46, %p47
      %p49 = scmp.ne.s32.totalorder %s40, %s41
      %p50 = scmp.eq.s32.totalorder %s23, 0
      %p51 = por %p49, %p50
      %p52 = scmp.ne.s32.totalorder %s40, %s41
      %p53 = scmp.eq.s32.totalorder %s24, 1
      %p54 = por %p52, %p53
      %p56 = scmp.ne.s32.totalorder %s41, %s55
      %p57 = scmp.eq.s32.totalorder %s24, 0
      %p58 = por %p56, %p57
      %s60 = sadd.s32 %s59, 1
      %p63 = scmp.eq.s32.totalorder %s18, 1
      %p64 = scmp.ne.s32.totalorder %s59, %s61
      %p65 = scmp.eq.s32.totalorder %s18, 0
      %p66 = por %p64, %p65
      %p67 = scmp.ne.s32.totalorder %s59, %s61
      %p68 = scmp.eq.s32.totalorder %s23, 1
      %p69 = por %p67, %p68
      %p70 = scmp.ne.s32.totalorder %s61, %s62
      %p71 = scmp.eq.s32.totalorder %s23, 0
      %p72 = por %p70, %p71
      %p73 = scmp.ne.s32.totalorder %s61, %s62
      %p74 = scmp.eq.s32.totalorder %s24, 1
      %p75 = por %p73, %p74
      %p77 = scmp.ne.s32.totalorder %s62, %s76
      %p78 = scmp.eq.s32.totalorder %s24, 0
      %p79 = por %p77, %p78
      %s81 = sadd.s32 %s80, 1
      %p84 = scmp.eq.s32.totalorder %s18, 1
      %p85 = scmp.ne.s32.totalorder %s80, %s82
      %p86 = scmp.eq.s32.totalorder %s18, 0
      %p87 = por %p85, %p86
      %p88 = scmp.ne.s32.totalorder %s80, %s82
      %p89 = scmp.eq.s32.totalorder %s23, 1
      %p90 = por %p88, %p89
      %p91 = scmp.ne.s32.totalorder %s82, %s83
      %p92 = scmp.eq.s32.totalorder %s23, 0
      %p93 = por %p91, %p92
      %p94 = scmp.ne.s32.totalorder %s82, %s83
      %p95 = scmp.eq.s32.totalorder %s24, 1
      %p96 = por %p94, %p95
      %p98 = scmp.ne.s32.totalorder %s83, %s97
      %p99 = scmp.eq.s32.totalorder %s24, 0
      %p100 = por %p98, %p99
      %s101 = ssub.s32 %s25, %s37
      %s102 = ssub.s32 %s26, %s33
      %s103 = sor.u32 %s101, %s102
      %p104 = scmp.eq.s32.totalorder %s103, 0
      %s106 = sadd.s32 %s105, 1
      %s107 = scalar_select %p104, %s105, %s106
      %p110 = pneg %p104
      %p111 = scmp.eq.s32.totalorder %s18, 1
      %p112 = por %p110, %p111
      %p113 = scmp.ne.s32.totalorder %s105, %s108
      %p114 = scmp.eq.s32.totalorder %s18, 0
      %p115 = por %p113, %p114
      %p116 = scmp.ne.s32.totalorder %s105, %s108
      %p117 = scmp.eq.s32.totalorder %s23, 1
      %p118 = por %p116, %p117
      %p119 = scmp.ne.s32.totalorder %s108, %s109
      %p120 = scmp.eq.s32.totalorder %s23, 0
      %p121 = por %p119, %p120
      %p122 = scmp.ne.s32.totalorder %s108, %s109
      %p123 = scmp.eq.s32.totalorder %s24, 1
      %p124 = por %p122, %p123
      %p126 = scmp.ne.s32.totalorder %s109, %s125
      %p127 = scmp.eq.s32.totalorder %s24, 0
      %p128 = por %p126, %p127
      %s129 = ssub.s32 %s25, %s37
      %s130 = ssub.s32 %s26, %s33
      %s131 = sor.u32 %s129, %s130
      %p132 = scmp.eq.s32.totalorder %s131, 0
      %s134 = sadd.s32 %s133, 1
      %s135 = scalar_select %p132, %s133, %s134
      %p138 = pneg %p132
      %p139 = scmp.eq.s32.totalorder %s18, 1
      %p140 = por %p138, %p139
      %p141 = scmp.ne.s32.totalorder %s133, %s136
      %p142 = scmp.eq.s32.totalorder %s18, 0
      %p143 = por %p141, %p142
      %p144 = scmp.ne.s32.totalorder %s133, %s136
      %p145 = scmp.eq.s32.totalorder %s23, 1
      %p146 = por %p144, %p145
      %p147 = scmp.ne.s32.totalorder %s136, %s137
      %p148 = scmp.eq.s32.totalorder %s23, 0
      %p149 = por %p147, %p148
      %p150 = scmp.ne.s32.totalorder %s136, %s137
      %p151 = scmp.eq.s32.totalorder %s24, 1
      %p152 = por %p150, %p151
      %p154 = scmp.ne.s32.totalorder %s137, %s153
      %p155 = scmp.eq.s32.totalorder %s24, 0
      %p156 = por %p154, %p155
      %s157 = ssub.s32 %s25, %s37
      %s158 = ssub.s32 %s26, %s33
      %s159 = sor.u32 %s157, %s158
      %p160 = scmp.eq.s32.totalorder %s159, 0
      %s162 = sadd.s32 %s161, 1
      %s163 = scalar_select %p160, %s161, %s162
      %p166 = pneg %p160
      %p167 = scmp.eq.s32.totalorder %s18, 1
      %p168 = por %p166, %p167
      %p169 = scmp.ne.s32.totalorder %s161, %s164
      %p170 = scmp.eq.s32.totalorder %s18, 0
      %p171 = por %p169, %p170
      %p172 = scmp.ne.s32.totalorder %s161, %s164
      %p173 = scmp.eq.s32.totalorder %s23, 1
      %p174 = por %p172, %p173
      %p175 = scmp.ne.s32.totalorder %s164, %s165
      %p176 = scmp.eq.s32.totalorder %s23, 0
      %p177 = por %p175, %p176
      %p178 = scmp.ne.s32.totalorder %s164, %s165
      %p179 = scmp.eq.s32.totalorder %s24, 1
      %p180 = por %p178, %p179
      %p182 = scmp.ne.s32.totalorder %s165, %s181
      %p183 = scmp.eq.s32.totalorder %s24, 0
      %p184 = por %p182, %p183
      %p185 = scmp.le.s32.totalorder 1, %s18
      %p186 = scmp.lt.s32.totalorder %s18, 3
      %p187 = pnand %p185, %p186
      %p188 = pneg %p187
      // Predicated region
      $region9: #{tpu_custom_call.1} parent=5 // pred_check
        _
      $region10: #{tpu_custom_call.1} parent=5 // pred_check_branch
        %190 = sbr.rel (%p187) target = $region12
      $region11: #{tpu_custom_call.1} parent=5 // pred_region
        %s191 = ssub.s32 %s18, 1
        // Predicated region
        $region13: #{tpu_custom_call.1} parent=11 // pred_check
          %p192 = pneg %p51
        $region14: #{tpu_custom_call.1} parent=11 // pred_check_branch
          %194 = sbr.rel (%p192) target = $region16
        $region15: #{tpu_custom_call.1} parent=11 // pred_region
          _
        $region16: #{tpu_custom_call.1} parent=11 // pred_fallthru
          _
        // Predicated region
        $region17: #{tpu_custom_call.1} parent=11 // pred_check
          %p195 = pneg %p72
        $region18: #{tpu_custom_call.1} parent=11 // pred_check_branch
          %197 = sbr.rel (%p195) target = $region20
        $region19: #{tpu_custom_call.1} parent=11 // pred_region
          %s199 = ssub.s32 64, 64
          %200 = vsyncadd [#allocation3], %s199
          %s202 = sshll.u32 [#allocation2], 4
          %s203 = int_to_ptr.vmem [resolvable:$true] %s202
          %205 = dma.hbm_to_vmem [thread:$0]  %s1, 64, %s203, [#allocation3]
        $region20: #{tpu_custom_call.1} parent=11 // pred_fallthru
          _
        // Predicated region
        $region21: #{tpu_custom_call.1} parent=11 // pred_check
          %p206 = pneg %p93
        $region22: #{tpu_custom_call.1} parent=11 // pred_check_branch
          %208 = sbr.rel (%p206) target = $region24
        $region23: #{tpu_custom_call.1} parent=11 // pred_region
          _
        $region24: #{tpu_custom_call.1} parent=11 // pred_fallthru
          _
      $region12: #{tpu_custom_call.1} parent=5 // pred_fallthru
        _
      %p209 = scmp.lt.s32.totalorder %s18, 2
      // Predicated region
      $region25: #{tpu_custom_call.1} parent=5 // pred_check
        %p210 = pneg %p209
      $region26: #{tpu_custom_call.1} parent=5 // pred_check_branch
        %212 = sbr.rel (%p210) target = $region28
      $region27: #{tpu_custom_call.1} parent=5 // pred_region
        // Predicated region
        $region29: #{tpu_custom_call.1} parent=27 // pred_check
          %p213 = pneg %p115
        $region30: #{tpu_custom_call.1} parent=27 // pred_check_branch
          %215 = sbr.rel (%p213) target = $region32
        $region31: #{tpu_custom_call.1} parent=27 // pred_region
          %s216 = sand.u32 %s18, 1
          %s217 = scalar_lea.sflag [#allocation6], %s216
          %s218 = sand.u32 %s105, 1
          %s219 = smul.addr %s218, 8
          %s220 = scalar_lea.vmem [#allocation5], %s219
          %s221 = smul.u32 2, %s26
          %s223 = ssub.s32 128, 128
          %224 = vsyncadd %s217, %s223
          %s225 = smul.addr %s25, 2
          %s226 = sadd.s32 %s221, %s225
          %s227 = smul.addr %s226, 64
          %s228 = scalar_lea.hbm %s3, %s227
          %s230 = sshll.u32 %s220, 4
          %s231 = int_to_ptr.vmem [resolvable:$true] %s230
          %233 = dma.hbm_to_vmem [thread:$0]  %s228, 128, %s231, %s217
        $region32: #{tpu_custom_call.1} parent=27 // pred_fallthru
          _
        // Predicated region
        $region33: #{tpu_custom_call.1} parent=27 // pred_check
          %p234 = pneg %p143
        $region34: #{tpu_custom_call.1} parent=27 // pred_check_branch
          %236 = sbr.rel (%p234) target = $region36
        $region35: #{tpu_custom_call.1} parent=27 // pred_region
          %s237 = sand.u32 %s18, 1
          %s238 = scalar_lea.sflag [#allocation6], %s237
          %s239 = sand.u32 %s133, 1
          %s240 = smul.addr %s239, 8
          %s241 = scalar_lea.vmem [#allocation7], %s240
          %s242 = smul.u32 2, %s26
          %s244 = ssub.s32 128, 128
          %245 = vsyncadd %s238, %s244
          %s246 = smul.addr %s25, 2
          %s247 = sadd.s32 %s242, %s246
          %s248 = smul.addr %s247, 64
          %s249 = scalar_lea.hbm %s4, %s248
          %s251 = sshll.u32 %s241, 4
          %s252 = int_to_ptr.vmem [resolvable:$true] %s251
          %254 = dma.hbm_to_vmem [thread:$0]  %s249, 128, %s252, %s238
        $region36: #{tpu_custom_call.1} parent=27 // pred_fallthru
          _
      $region28: #{tpu_custom_call.1} parent=5 // pred_fallthru
        _
      %p255 = scmp.le.s32.totalorder 1, %s18
      %p256 = scmp.lt.s32.totalorder %s18, 3
      %p257 = pnand %p255, %p256
      %p258 = pneg %p257
      // Predicated region
      $region37: #{tpu_custom_call.1} parent=5 // pred_check
        _
      $region38: #{tpu_custom_call.1} parent=5 // pred_check_branch
        %260 = sbr.rel (%p257) target = $region40
      $region39: #{tpu_custom_call.1} parent=5 // pred_region
        %s261 = ssub.s32 %s18, 1
        // Predicated region
        $region41: #{tpu_custom_call.1} parent=39 // pred_check
          %p262 = pneg %p72
        $region42: #{tpu_custom_call.1} parent=39 // pred_check_branch
          %264 = sbr.rel (%p262) target = $region44
        $region43: #{tpu_custom_call.1} parent=39 // pred_region
          %265 = dma.done [#allocation3], 64
        $region44: #{tpu_custom_call.1} parent=39 // pred_fallthru
          _
        %s266 = sand.u32 %s23, 1
        %s267 = scalar_lea.sflag [#allocation6], %s266
        %s268 = sand.u32 %s108, 1
        %s269 = smul.addr %s268, 8
        %s270 = scalar_lea.vmem [#allocation5], %s269
        // Predicated region
        $region45: #{tpu_custom_call.1} parent=39 // pred_check
          %p271 = pneg %p121
        $region46: #{tpu_custom_call.1} parent=39 // pred_check_branch
          %273 = sbr.rel (%p271) target = $region48
        $region47: #{tpu_custom_call.1} parent=39 // pred_region
          %274 = dma.done %s267, 128
        $region48: #{tpu_custom_call.1} parent=39 // pred_fallthru
          _
        %s275 = sand.u32 %s23, 1
        %s276 = scalar_lea.sflag [#allocation6], %s275
        %s277 = sand.u32 %s136, 1
        %s278 = smul.addr %s277, 8
        %s279 = scalar_lea.vmem [#allocation7], %s278
        // Predicated region
        $region49: #{tpu_custom_call.1} parent=39 // pred_check
          %p280 = pneg %p149
        $region50: #{tpu_custom_call.1} parent=39 // pred_check_branch
          %282 = sbr.rel (%p280) target = $region52
        $region51: #{tpu_custom_call.1} parent=39 // pred_region
          %283 = dma.done %s276, 128
        $region52: #{tpu_custom_call.1} parent=39 // pred_fallthru
          _
        %p284 = pneg %p51
        %p285 = pneg %p48
        %p286 = pneg %p72
        %p287 = pneg %p69
        %p288 = pneg %p93
        %p289 = pneg %p90
        %s290 = sand.u32 %s23, 1
        %s291 = scalar_lea.sflag [#allocation6], %s290
        %s292 = sand.u32 %s108, 1
        %s293 = smul.addr %s292, 8
        %s294 = scalar_lea.vmem [#allocation5], %s293
        %p295 = pneg %p121
        %p296 = pneg %p118
        %s297 = sand.u32 %s23, 1
        %s298 = scalar_lea.sflag [#allocation6], %s297
        %s299 = sand.u32 %s136, 1
        %s300 = smul.addr %s299, 8
        %s301 = scalar_lea.vmem [#allocation7], %s300
        %p302 = pneg %p149
        %p303 = pneg %p146
        %p304 = pneg %p177
        %p305 = pneg %p174
        %s306 = sand.u32 %s164, 1
        %s307 = scalar_lea.sflag [#allocation4], %s306
        %s308 = sand.u32 %s164, 1
        %s309 = smul.addr %s308, 8
        %s310 = scalar_lea.vmem [#allocation8], %s309
        %s311 = smul.u32 2, %s28
        %s312 = smul.u32 2, %s28
        %s313 = smul.u32 2, %s28
        %v314 = vld [vmem:[%s0] sm:$0xf]
        %v315 = vld [vmem:[#allocation2] sm:$0xf]
        %v316 = vld [vmem:[%s2] sm:$0xf]
        %v317 = vld [vmem:[%s270] sm:$0xff]
        %v318 = vld [vmem:[%s279] sm:$0xff]
        %v320 = vcombine.high %v318, %v318
        %vm321 = vcmask 31744
        %v323 = vsel %vm321, %v315, 0
        %vm325 = vcmask 1043456
        %v326 = vsel %vm325, %v318, 0
        %v328 = vsel %vm325, %v320, 0
        %330 = vmatprep.subr.mxu0 0.0
        %331 = vmatpush1.msra.mxu0 0.0
        %332 = vmatprep.subr.mxu0 0.0
        %333 = vmatpush1.msra.mxu0 0.0
        %334 = vmatprep.subr.mxu0 0.0
        %335 = vmatpush1.msra.mxu0 0.0
        %336 = vmatprep.subr.mxu0 0.0
        %337 = vmatpush1.msra.mxu0 0.0
        %338 = vmatprep.subr.mxu0 0.0
        %339 = vmatpush1.msra.mxu0 0.0
        %340 = vmatprep.subr.mxu0 0.0
        %341 = vmatpush1.msra.mxu0 0.0
        %342 = vmatprep.subr.mxu0 0.0
        %343 = vmatpush1.msra.mxu0 0.0
        %344 = vmatprep.subr.mxu0 0.0
        %345 = vmatpush1.msra.mxu0 0.0
        %346 = vmatprep.subr.mxu0 0.0
        %347 = vmatpush1.msra.mxu0 0.0
        %348 = vmatprep.subr.mxu0 0.0
        %349 = vmatpush1.msra.mxu0 0.0
        %350 = vmatprep.subr.mxu0 0.0
        %351 = vmatpush1.msra.mxu0 0.0
        %352 = vmatprep.subr.mxu0 0.0
        %353 = vmatpush1.msra.mxu0 0.0
        %354 = vmatprep.subr.mxu0 0.0
        %355 = vmatpush1.msra.mxu0 0.0
        %356 = vmatprep.subr.mxu0 0.0
        %357 = vmatpush1.msra.mxu0 0.0
        %358 = vmatprep.subr.mxu0 0.0
        %359 = vmatpush1.msra.mxu0 0.0
        %360 = vmatprep.subr.mxu0 %v328
        %361 = vmatpush1.msra.mxu0 %v326
        %362 = vmatprep.subr.mxu0 0.0
        %363 = vmatpush2.msra.mxu0 0.0
        %364 = vmatprep.subr.mxu0 0.0
        %365 = vmatpush2.msra.mxu0 0.0
        %366 = vmatprep.subr.mxu0 0.0
        %367 = vmatpush2.msra.mxu0 0.0
        %368 = vmatprep.subr.mxu0 0.0
        %369 = vmatpush2.msra.mxu0 0.0
        %370 = vmatprep.subr.mxu0 0.0
        %371 = vmatpush2.msra.mxu0 0.0
        %372 = vmatprep.subr.mxu0 0.0
        %373 = vmatpush2.msra.mxu0 0.0
        %374 = vmatprep.subr.mxu0 0.0
        %375 = vmatpush2.msra.mxu0 0.0
        %376 = vmatprep.subr.mxu0 0.0
        %377 = vmatpush2.msra.mxu0 0.0
        %378 = vmatprep.subr.mxu0 0.0
        %379 = vmatpush2.msra.mxu0 0.0
        %380 = vmatprep.subr.mxu0 0.0
        %381 = vmatpush2.msra.mxu0 0.0
        %382 = vmatprep.subr.mxu0 0.0
        %383 = vmatpush2.msra.mxu0 0.0
        %384 = vmatprep.subr.mxu0 0.0
        %385 = vmatpush2.msra.mxu0 0.0
        %386 = vmatprep.subr.mxu0 0.0
        %387 = vmatpush2.msra.mxu0 0.0
        %388 = vmatprep.subr.mxu0 0.0
        %389 = vmatpush2.msra.mxu0 0.0
        %390 = vmatprep.subr.mxu0 0.0
        %391 = vmatpush2.msra.mxu0 0.0
        %392 = vmatprep.subr.mxu0 0.0
        %393 = vmatpush2.msra.mxu0 0.0
        %394 = vmatprep.mubr.f32.mxu0 0.0
        %395 = vmatmul.mubr.f32.gmra.mxu0 %v323
        %v396 = vpop.f32.mrf.mxu0
        %v397 = vadd.f32 0.0, %v396
        %v398 = vpop.f32.mrf.mxu0
        %v399 = vadd.f32 0.0, %v398
        %400 = vdwg.mxu0
        %v402 = vcombine.high %v317, %v317
        %v404 = vsel %vm321, %v314, 0
        %v406 = vsel %vm325, %v317, 0
        %v408 = vsel %vm325, %v402, 0
        %410 = vmatprep.subr.mxu0 0.0
        %411 = vmatpush1.msra.mxu0 0.0
        %412 = vmatprep.subr.mxu0 0.0
        %413 = vmatpush1.msra.mxu0 0.0
        %414 = vmatprep.subr.mxu0 0.0
        %415 = vmatpush1.msra.mxu0 0.0
        %416 = vmatprep.subr.mxu0 0.0
        %417 = vmatpush1.msra.mxu0 0.0
        %418 = vmatprep.subr.mxu0 0.0
        %419 = vmatpush1.msra.mxu0 0.0
        %420 = vmatprep.subr.mxu0 0.0
        %421 = vmatpush1.msra.mxu0 0.0
        %422 = vmatprep.subr.mxu0 0.0
        %423 = vmatpush1.msra.mxu0 0.0
        %424 = vmatprep.subr.mxu0 0.0
        %425 = vmatpush1.msra.mxu0 0.0
        %426 = vmatprep.subr.mxu0 0.0
        %427 = vmatpush1.msra.mxu0 0.0
        %428 = vmatprep.subr.mxu0 0.0
        %429 = vmatpush1.msra.mxu0 0.0
        %430 = vmatprep.subr.mxu0 0.0
        %431 = vmatpush1.msra.mxu0 0.0
        %432 = vmatprep.subr.mxu0 0.0
        %433 = vmatpush1.msra.mxu0 0.0
        %434 = vmatprep.subr.mxu0 0.0
        %435 = vmatpush1.msra.mxu0 0.0
        %436 = vmatprep.subr.mxu0 0.0
        %437 = vmatpush1.msra.mxu0 0.0
        %438 = vmatprep.subr.mxu0 0.0
        %439 = vmatpush1.msra.mxu0 0.0
        %440 = vmatprep.subr.mxu0 %v408
        %441 = vmatpush1.msra.mxu0 %v406
        %442 = vmatprep.subr.mxu0 0.0
        %443 = vmatpush2.msra.mxu0 0.0
        %444 = vmatprep.subr.mxu0 0.0
        %445 = vmatpush2.msra.mxu0 0.0
        %446 = vmatprep.subr.mxu0 0.0
        %447 = vmatpush2.msra.mxu0 0.0
        %448 = vmatprep.subr.mxu0 0.0
        %449 = vmatpush2.msra.mxu0 0.0
        %450 = vmatprep.subr.mxu0 0.0
        %451 = vmatpush2.msra.mxu0 0.0
        %452 = vmatprep.subr.mxu0 0.0
        %453 = vmatpush2.msra.mxu0 0.0
        %454 = vmatprep.subr.mxu0 0.0
        %455 = vmatpush2.msra.mxu0 0.0
        %456 = vmatprep.subr.mxu0 0.0
        %457 = vmatpush2.msra.mxu0 0.0
        %458 = vmatprep.subr.mxu0 0.0
        %459 = vmatpush2.msra.mxu0 0.0
        %460 = vmatprep.subr.mxu0 0.0
        %461 = vmatpush2.msra.mxu0 0.0
        %462 = vmatprep.subr.mxu0 0.0
        %463 = vmatpush2.msra.mxu0 0.0
        %464 = vmatprep.subr.mxu0 0.0
        %465 = vmatpush2.msra.mxu0 0.0
        %466 = vmatprep.subr.mxu0 0.0
        %467 = vmatpush2.msra.mxu0 0.0
        %468 = vmatprep.subr.mxu0 0.0
        %469 = vmatpush2.msra.mxu0 0.0
        %470 = vmatprep.subr.mxu0 0.0
        %471 = vmatpush2.msra.mxu0 0.0
        %472 = vmatprep.subr.mxu0 0.0
        %473 = vmatpush2.msra.mxu0 0.0
        %474 = vmatprep.mubr.f32.mxu0 0.0
        %475 = vmatmul.mubr.f32.gmra.mxu0 %v404
        %v476 = vpop.f32.mrf.mxu0
        %v477 = vadd.f32 %v397, %v476
        %v478 = vpop.f32.mrf.mxu0
        %v479 = vadd.f32 %v399, %v478
        %480 = vdwg.mxu0
        %482 = vset.pattern.permute.xlu0 0
        %483 = vperm.xlu0 %482, %v316
        %v484 = vpop.permute.xlu0 %483
        %v486 = vadd.f32 %v477, %v484
        %v487 = vadd.f32 %v479, %v484
        %v490 = vcombine.low %v486, %v487
        %492 = vst [vmem:[%s310] sm:$0xff] %v490
        %s493 = sand.u32 %s164, 1
        %s494 = scalar_lea.sflag [#allocation4], %s493
        %s495 = sand.u32 %s164, 1
        %s496 = smul.addr %s495, 8
        %s497 = scalar_lea.vmem [#allocation8], %s496
        // Predicated region
        $region53: #{tpu_custom_call.1} parent=39 // pred_check
          %p498 = pneg %p174
        $region54: #{tpu_custom_call.1} parent=39 // pred_check_branch
          %500 = sbr.rel (%p498) target = $region56
        $region55: #{tpu_custom_call.1} parent=39 // pred_region
          %s501 = smul.u32 2, %s28
          %s503 = ssub.s32 128, 128
          %504 = vsyncadd %s494, %s503
          %s505 = smul.addr %s27, 2
          %s506 = sadd.s32 %s501, %s505
          %s507 = smul.addr %s506, 64
          %s508 = scalar_lea.hbm %s5, %s507
          %s510 = sshll.u32 %s497, 4
          %s511 = int_to_ptr.vmem [resolvable:$true] %s510
          %513 = dma.vmem_to_hbm [thread:$0]  %s511, 128, %s508, %s494
        $region56: #{tpu_custom_call.1} parent=39 // pred_fallthru
          _
      $region40: #{tpu_custom_call.1} parent=5 // pred_fallthru
        _
      %p514 = scmp.le.s32.totalorder 2, %s18
      // Predicated region
      $region57: #{tpu_custom_call.1} parent=5 // pred_check
        %p515 = pneg %p514
      $region58: #{tpu_custom_call.1} parent=5 // pred_check_branch
        %517 = sbr.rel (%p515) target = $region60
      $region59: #{tpu_custom_call.1} parent=5 // pred_region
        %s518 = ssub.s32 %s18, 2
        // Predicated region
        $region61: #{tpu_custom_call.1} parent=59 // pred_check
          %p519 = pneg %p180
        $region62: #{tpu_custom_call.1} parent=59 // pred_check_branch
          %521 = sbr.rel (%p519) target = $region64
        $region63: #{tpu_custom_call.1} parent=59 // pred_region
          %s522 = sand.u32 %s165, 1
          %s523 = scalar_lea.sflag [#allocation4], %s522
          %s524 = sand.u32 %s165, 1
          %s525 = smul.addr %s524, 8
          %s526 = scalar_lea.vmem [#allocation8], %s525
          %527 = dma.done %s523, 128
        $region64: #{tpu_custom_call.1} parent=59 // pred_fallthru
          _
      $region60: #{tpu_custom_call.1} parent=5 // pred_fallthru
        _
    $region6: #{tpu_custom_call.1} parent=1 // loop_footer
      %s22 = sadd.s32 1, %s18
    $region7: #{tpu_custom_call.1} parent=1 // loop_footer_branch
      %17 = sbr.rel target = $region3
    $region8: #{tpu_custom_call.1} parent=1 // loop_exit
      _
    %528 = vsyncpa [#allocation3], 1
    %s529 = scalar_lea.sflag [#allocation3], 1
    %530 = vsyncpa %s529, 1
    %531 = vsyncpa [#allocation6], 1
    %s532 = scalar_lea.sflag [#allocation6], 1
    %533 = vsyncpa %s532, 1
    %534 = vsyncpa [#allocation4], 1
    %s535 = scalar_lea.sflag [#allocation4], 1
    %536 = vsyncpa %s535, 1

</llo_original>
